<compile_context>
chip_gen: v7x
topology: tpu7x:2x2x1
jax: 0.10.0
libtpu: 0.0.40
codegen_flags: <defaults>
</compile_context>

<pallas_src>
import functools

import jax
import jax.numpy as jnp
from jax import lax
from jax.experimental import pallas as pl
from jax.experimental.pallas import tpu as pltpu


# --------------------------------------------------------------------------- #
# Hardware / sizing helpers
# --------------------------------------------------------------------------- #

def _tpu_vmem_and_kind():
    vmem_cap = 64 * 2**20  # conservative default (v7x per-core VMEM)
    try:
        vmem_cap = int(pltpu.get_tpu_info().vmem_capacity_bytes)
    except Exception:
        pass
    kind = ""
    try:
        kind = jax.devices()[0].device_kind.lower()
    except Exception:
        pass
    return vmem_cap, kind


def _largest_divisor_multiple(n, step, cap):
    """Largest divisor of n that is a multiple of `step` and <= cap (None if none)."""
    best = None
    d = step
    cap = min(cap, n)
    while d <= cap:
        if n % d == 0:
            best = d
        d += step
    return best


def _pick_tiles(R, Ktot, itemsize, tile_bytes_max):
    """Pick (tile_r, tile_k) for blocks of shape (tile_r, tile_k, 128)."""
    bpk = 128 * itemsize  # bytes per row per 128-lane column
    if R % 8 != 0 or R * 8 * bpk <= tile_bytes_max:
        # TODO(synk): very large R that is not a multiple of 8 falls back to full rows.
        tile_r = R
    else:
        cap_r = max(8, tile_bytes_max // (8 * bpk))
        tile_r = _largest_divisor_multiple(R, 8, cap_r) or R
    cap_k = max(1, tile_bytes_max // max(tile_r * bpk, 1))
    if Ktot <= cap_k:
        tile_k = Ktot
    else:
        tile_k = _largest_divisor_multiple(Ktot, 8, cap_k) or Ktot
    return tile_r, tile_k


def _vmem_limit(need, vmem_cap):
    lim = max(16 * 2**20, 2 * need)
    lim = min(lim, int(0.7 * vmem_cap))
    return int(max(lim, need + (2 << 20)))


# --------------------------------------------------------------------------- #
# Kernels
# --------------------------------------------------------------------------- #

def _stats_kernel(x_ref, s_ref):
    """x_ref: (tile_r, tile_k, 128) tile of the (R, K, 128) view.
    s_ref:  (tile_r, 256) resident f32 accumulator: [:, :128] = per-lane-column row sums,
            [:, 128:] = per-lane-column row sums of squares.  Pure VPU adds in the loop;
            the single cross-lane reduce happens once, in the JAX glue."""

    @pl.when(pl.program_id(2) == 0)
    def _init():
        s_ref[...] = jnp.zeros_like(s_ref)

    x = x_ref[...].astype(jnp.float32)
    s_ref[:, 0:128] += jnp.sum(x, axis=1)
    s_ref[:, 128:256] += jnp.sum(x * x, axis=1)


def _norm_kernel(x_ref, ss_ref, o_ref):
    """y = x * scale[row] + shift[row]; scale/shift already fold mean, std, eps, mult, add.
    Compute dtype follows ss_ref (bf16 on bf16-native chips, else f32)."""
    scale = ss_ref[:, 0:1]
    shift = ss_ref[:, 1:2]
    y = x_ref[...].astype(scale.dtype) * scale + shift
    o_ref[...] = y.astype(o_ref.dtype)


def _make_fused_kernel(mtot, eps):
    """Single-call path: x resident in VMEM; stats + normalize in one kernel."""
    denom = float(max(mtot - 1, 1))
    mtotf = float(mtot)

    def kernel(params_ref, x_ref, o_ref):
        x = x_ref[...].astype(jnp.float32)            # (N, C, H*W)
        s = jnp.sum(x, axis=2, keepdims=True)         # (N, C, 1) lane reduce
        q = jnp.sum(x * x, axis=2, keepdims=True)
        s = jnp.sum(s, axis=0, keepdims=True)         # (1, C, 1)
        q = jnp.sum(q, axis=0, keepdims=True)
        mean = s / mtotf
        var = jnp.maximum((q - mtotf * mean * mean) / denom, 0.0)
        std = jnp.sqrt(var)
        inv = lax.rsqrt(std + eps)                    # 1/sqrt(std + eps): MyNorm spec (sqrt of STD)
        scale = inv * params_ref[0]                   # fold learnable mult
        shift = params_ref[1] - mean * scale          # fold mean and learnable add
        o_ref[...] = (x * scale + shift).astype(o_ref.dtype)

    return kernel


# --------------------------------------------------------------------------- #
# Wrapper
# --------------------------------------------------------------------------- #

def mynorm(x, mult, add, eps=1e-4, *, force_two_pass=False, tile_r=None, tile_k=None):
    """MyNorm.forward for x of shape (N, C, H, W). Returns same shape & dtype."""
    N, C, H, W = x.shape
    R = N * C                       # rows = (n, c) pairs; channel = row % C
    M = H * W                       # lane axis
    Mtot = N * H * W                # reduction count per channel
    itemsize = jnp.dtype(x.dtype).itemsize

    vmem_cap, kind = _tpu_vmem_and_kind()
    scoped_budget = min(48 * 2**20, vmem_cap // 3)          # ~42 MiB v5e/v6e, ~21 MiB v7x
    tile_bytes_max = max(512 * 1024, scoped_budget // 10)   # ~2-4 MiB per streaming tile

    # ---------------- fused single-call fast path (slab resident in VMEM) -------------
    c_pad = ((C + 7) // 8) * 8
    m_pad128 = ((M + 127) // 128) * 128
    fused_need = N * c_pad * m_pad128 * (2 * itemsize + 8) + (1 << 20)
    fused_budget = int(vmem_cap * 0.35)
    if (not force_two_pass) and tile_r is None and tile_k is None and fused_need <= fused_budget:
        x3 = x.reshape(N, C, M)
        params = jnp.stack([jnp.asarray(mult, jnp.float32),
                            jnp.asarray(add, jnp.float32)])          # (2,) in SMEM
        out3 = pl.pallas_call(
            _make_fused_kernel(Mtot, eps),
            out_shape=jax.ShapeDtypeStruct((N, C, M), x.dtype),
            in_specs=[pl.BlockSpec(memory_space=pltpu.MemorySpace.SMEM),
                      pl.BlockSpec((N, C, M), lambda: (0, 0, 0))],
            out_specs=pl.BlockSpec((N, C, M), lambda: (0, 0, 0)),
            compiler_params=pltpu.CompilerParams(
                vmem_limit_bytes=_vmem_limit(fused_need, vmem_cap)),
            cost_estimate=pl.CostEstimate(
                flops=6 * N * C * M, transcendentals=2 * C,
                bytes_accessed=2 * N * C * M * itemsize),
        )(params, x3)
        return out3.reshape(N, C, H, W)

    # ---------------- two-pass streaming path ------------------------------------------
    x2d = x.reshape(R, M)                               # free view, no transpose
    if M % 128 != 0:
        M_pad = ((M + 127) // 128) * 128
        x2d = jnp.pad(x2d, ((0, 0), (0, M_pad - M)))    # zeros are neutral for sum/sumsq
    else:
        M_pad = M
    Ktot = M_pad // 128

    auto_r, auto_k = _pick_tiles(R, Ktot, itemsize, tile_bytes_max)
    if tile_r is None:
        tile_r = auto_r
    if tile_k is None:
        tile_k = auto_k
    assert R % tile_r == 0 and (tile_r % 8 == 0 or tile_r == R), \
        f"tile_r={tile_r} must divide N*C={R} and be a multiple of 8 (or equal N*C)"
    assert Ktot % tile_k == 0 and (tile_k % 8 == 0 or tile_k == Ktot), \
        f"tile_k={tile_k} must divide {Ktot} and be a multiple of 8 (or equal {Ktot})"

    tile_m = tile_k * 128
    grid_r = R // tile_r
    grid_m = Ktot // tile_k

    # Split the (otherwise serial) reduction axis across both v7x TensorCores when the
    # row axis cannot provide the parallelism; same trip count, so harmless on 1-TC chips.
    n_par = 2 if (grid_r == 1 and grid_m % 2 == 0 and grid_m >= 2) else 1
    grid_j = grid_m // n_par

    tile_in = tile_r * tile_m * itemsize
    tile_f32 = tile_r * tile_m * 4
    slab = R * M_pad * itemsize

    # ---- pass 1: per-row partial sums / sums of squares (lane-dense accumulator) ------
    x3 = x2d.reshape(R, Ktot, 128)                      # free view of the same buffer
    stats_need = 2 * tile_in + 2 * tile_f32 + 4 * tile_r * 256 * 4 + (2 << 20)
    row_stats = pl.pallas_call(
        _stats_kernel,
        out_shape=jax.ShapeDtypeStruct((n_par, R, 256), jnp.float32),
        grid=(n_par, grid_r, grid_j),
        in_specs=[pl.BlockSpec((tile_r, tile_k, 128),
                               lambda p, i, j: (i, p * grid_j + j, 0))],
        out_specs=pl.BlockSpec((None, tile_r, 256), lambda p, i, j: (p, i, 0)),
        compiler_params=pltpu.CompilerParams(
            dimension_semantics=("parallel", "parallel", "arbitrary"),
            vmem_limit_bytes=_vmem_limit(stats_need, vmem_cap)),
        cost_estimate=pl.CostEstimate(
            flops=3 * R * M_pad, transcendentals=0,
            bytes_accessed=slab + n_par * R * 256 * 4),
    )(x3)

    # ---- O(C) glue: combine partials, clamp var, rsqrt, fold learnable mult/add -------
    sums = jnp.sum(row_stats[:, :, 0:128], axis=(0, 2))          # (R,)
    sqs = jnp.sum(row_stats[:, :, 128:256], axis=(0, 2))         # (R,)
    ch_s = sums.reshape(N, C).sum(axis=0)                        # (C,)
    ch_q = sqs.reshape(N, C).sum(axis=0)
    mean = ch_s / Mtot
    var = jnp.maximum((ch_q - Mtot * mean * mean) / max(Mtot - 1, 1), 0.0)
    std = jnp.sqrt(var)
    inv = lax.rsqrt(std + eps)      # 1 / sqrt(std + eps): sqrt of the STD, per MyNorm spec
    scale = inv * jnp.asarray(mult, jnp.float32)
    shift = jnp.asarray(add, jnp.float32) - mean * scale

    # bf16-native math in pass 2 on bf16-capable VPUs (v6e/v7x); keep f32 on v5.
    use_bf16 = (x.dtype == jnp.bfloat16) and ("v5" not in kind)
    comp_dtype = jnp.bfloat16 if use_bf16 else jnp.float32
    row_ss = jnp.stack([jnp.tile(scale, N), jnp.tile(shift, N)], axis=1).astype(comp_dtype)

    # ---- pass 2: y = x * scale[row] + shift[row] ---------------------------------------
    # TODO(synk): for N*C < 8 the sublane density here is low; folding H into the row
    #             axis (review item) is not implemented.
    norm_need = 4 * tile_in + 2 * tile_f32 + (2 << 20)
    out2d = pl.pallas_call(
        _norm_kernel,
        out_shape=jax.ShapeDtypeStruct((R, M_pad), x.dtype),
        grid=(grid_r, grid_m),
        in_specs=[pl.BlockSpec((tile_r, tile_m), lambda i, j: (i, j)),
                  pl.BlockSpec((tile_r, 2), lambda i, j: (i, 0))],
        out_specs=pl.BlockSpec((tile_r, tile_m), lambda i, j: (i, j)),
        compiler_params=pltpu.CompilerParams(
            dimension_semantics=("parallel", "parallel"),
            vmem_limit_bytes=_vmem_limit(norm_need, vmem_cap)),
        cost_estimate=pl.CostEstimate(
            flops=2 * R * M_pad, transcendentals=0,
            bytes_accessed=2 * slab + R * 2 * 4),
    )(x2d, row_ss)

    if M_pad != M:
        out2d = out2d[:, :M]
    return out2d.reshape(N, C, H, W)


# --------------------------------------------------------------------------- #
# Reference + self-test
# --------------------------------------------------------------------------- #

def _mynorm_ref(x, mult, add, eps=1e-4):
    """Pure-JAX mirror of the PyTorch forward."""
    xf = x.astype(jnp.float32)
    mean = jnp.mean(xf, axis=(0, 2, 3), keepdims=True)
    std = jnp.std(xf, axis=(0, 2, 3), keepdims=True, ddof=1)   # unbiased, like torch.std
    y = (xf - mean) / jnp.sqrt(std + eps)
    return (y * mult + add).astype(x.dtype)


if __name__ == "__main__":
    key = jax.random.PRNGKey(0)
    eps = 1e-4
    mult = jnp.float32(1.5)
    add = jnp.float32(0.25)

    cases = [
        # (shape, dtype, tol, static kwargs)
        ((2, 4, 16, 16), jnp.float32, 5e-4, {}),                         # fused fast path
        ((2, 4, 64, 64), jnp.float32, 5e-4,
         dict(force_two_pass=True, tile_k=8)),                           # 2-core split + multi-step reduce
        ((4, 4, 64, 64), jnp.float32, 5e-4,
         dict(force_two_pass=True, tile_r=8, tile_k=8)),                 # row blocking + lane tiling
        ((2, 4, 10, 10), jnp.float32, 5e-4, dict(force_two_pass=True)),  # H*W % 128 != 0 (padded)
        ((2, 4, 16, 16), jnp.bfloat16, 1e-1, dict(force_two_pass=True)), # bf16 normalize path
    ]

    for idx, (shape, dtype, tol, kw) in enumerate(cases):
        k = jax.random.fold_in(key, idx)
        x = jax.random.normal(k, shape, dtype=jnp.float32) * 2.0 + 0.5
        x = x.astype(dtype)
        fn = jax.jit(functools.partial(mynorm, eps=eps, **kw))
        out = jax.block_until_ready(fn(x, mult, add))
        ref = _mynorm_ref(x, mult, add, eps)
        assert out.shape == x.shape and out.dtype == x.dtype
        err = float(jnp.max(jnp.abs(out.astype(jnp.float32) - ref.astype(jnp.float32))))
        assert err < tol, f"case {idx} shape={shape} dtype={dtype}: max abs err {err}"

    print("KERNEL_OK")
</pallas_src>

<mosaic_0001>
module attributes {stable_mosaic.version = 11 : i64} {
  func.func @kernel(%arg0: memref<2xf32, #tpu.memory_space<smem>>, %arg1: memref<2x4x256xf32, #tpu.memory_space<vmem>>, %arg2: memref<2x4x256xf32, #tpu.memory_space<vmem>>) attributes {dimension_semantics = [], scalar_prefetch = 0 : i64, scratch_operands = 0 : i64, tpu.core_type = #tpu.core_type<tc>} {
    %c0 = arith.constant 0 : index
    %c0_0 = arith.constant 0 : index
    %c0_1 = arith.constant 0 : index
    %0 = vector.load %arg1[%c0, %c0_0, %c0_1] : memref<2x4x256xf32, #tpu.memory_space<vmem>>, vector<2x4x256xf32>
    %cst = arith.constant dense<0.000000e+00> : vector<2x4xf32>
    %1 = vector.multi_reduction <add>, %0, %cst [2] : vector<2x4x256xf32> to vector<2x4xf32>
    %2 = vector.shape_cast %1 : vector<2x4xf32> to vector<2x4x1xf32>
    %3 = arith.mulf %0, %0 : vector<2x4x256xf32>
    %cst_2 = arith.constant dense<0.000000e+00> : vector<2x4xf32>
    %4 = vector.multi_reduction <add>, %3, %cst_2 [2] : vector<2x4x256xf32> to vector<2x4xf32>
    %5 = vector.shape_cast %4 : vector<2x4xf32> to vector<2x4x1xf32>
    %cst_3 = arith.constant dense<0.000000e+00> : vector<4x1xf32>
    %6 = vector.multi_reduction <add>, %2, %cst_3 [0] : vector<2x4x1xf32> to vector<4x1xf32>
    %7 = vector.shape_cast %6 : vector<4x1xf32> to vector<1x4x1xf32>
    %cst_4 = arith.constant dense<0.000000e+00> : vector<4x1xf32>
    %8 = vector.multi_reduction <add>, %5, %cst_4 [0] : vector<2x4x1xf32> to vector<4x1xf32>
    %9 = vector.shape_cast %8 : vector<4x1xf32> to vector<1x4x1xf32>
    %cst_5 = arith.constant 5.120000e+02 : f32
    %10 = vector.broadcast %cst_5 : f32 to vector<1x4x1xf32>
    %11 = arith.divf %7, %10 : vector<1x4x1xf32>
    %cst_6 = arith.constant 5.120000e+02 : f32
    %12 = vector.broadcast %cst_6 : f32 to vector<1x4x1xf32>
    %13 = arith.mulf %12, %11 : vector<1x4x1xf32>
    %14 = arith.mulf %13, %11 : vector<1x4x1xf32>
    %15 = arith.subf %9, %14 : vector<1x4x1xf32>
    %cst_7 = arith.constant 5.110000e+02 : f32
    %16 = vector.broadcast %cst_7 : f32 to vector<1x4x1xf32>
    %17 = arith.divf %15, %16 : vector<1x4x1xf32>
    %cst_8 = arith.constant 0.000000e+00 : f32
    %18 = vector.broadcast %cst_8 : f32 to vector<1x4x1xf32>
    %19 = arith.maximumf %17, %18 : vector<1x4x1xf32>
    %20 = math.sqrt %19 : vector<1x4x1xf32>
    %cst_9 = arith.constant 9.99999974E-5 : f32
    %21 = vector.broadcast %cst_9 : f32 to vector<1x4x1xf32>
    %22 = arith.addf %20, %21 : vector<1x4x1xf32>
    %23 = math.rsqrt %22 : vector<1x4x1xf32>
    %c0_10 = arith.constant 0 : index
    %24 = memref.load %arg0[%c0_10] : memref<2xf32, #tpu.memory_space<smem>>
    %25 = vector.broadcast %24 : f32 to vector<1x4x1xf32>
    %26 = arith.mulf %23, %25 : vector<1x4x1xf32>
    %c1 = arith.constant 1 : index
    %27 = memref.load %arg0[%c1] : memref<2xf32, #tpu.memory_space<smem>>
    %28 = arith.mulf %11, %26 : vector<1x4x1xf32>
    %29 = vector.broadcast %27 : f32 to vector<1x4x1xf32>
    %30 = arith.subf %29, %28 : vector<1x4x1xf32>
    %31 = vector.broadcast %26 : vector<1x4x1xf32> to vector<2x4x256xf32>
    %32 = arith.mulf %0, %31 : vector<2x4x256xf32>
    %33 = vector.broadcast %30 : vector<1x4x1xf32> to vector<2x4x256xf32>
    %34 = arith.addf %32, %33 : vector<2x4x256xf32>
    %c0_11 = arith.constant 0 : index
    %c0_12 = arith.constant 0 : index
    %c0_13 = arith.constant 0 : index
    %35 = vector.load %arg2[%c0_11, %c0_12, %c0_13] : memref<2x4x256xf32, #tpu.memory_space<vmem>>, vector<2x4x256xf32>
    tpu.vector_store %arg2[%c0_11, %c0_12, %c0_13], %34 {strides = array<i32>} : memref<2x4x256xf32, #tpu.memory_space<vmem>>, vector<2x4x256xf32>,
    return
  }
}

</mosaic_0001>

<llo_original>
// kernel: mynorm.1
$region0: #{mynorm.1}
  #allocation0 [shape = 'u32[]', space=smem, size = 0x4, offset = 0x4, fixed_abs, tag = 'smem constant byte address 0x4 - core index']
  #allocation1 [shape = 'u32[144,128]{1,0:T(1,128)}', space=vmem, size = 0x12000, scoped, tag = 'internal scratch']
  %s0 = inlined_call_operand.vmem [shape: f32[2], index: 0, kind: input, shape index: {}]
  %s1 = inlined_call_operand.vmem [shape: f32[2,4,256], index: 1, kind: input, shape index: {}]
  %s2 = inlined_call_operand.vmem [shape: f32[2,4,256], index: 2, kind: output, shape index: {}]
  %s3 = sld [smem:[#allocation0]]
  $region22: #{mynorm.1} parent=0
    _
  %s5 = ssub.s32 1, %s3
  %s6 = scalar_select 0, %s5, %s3
  $region1: #{mynorm.1} parent=0
    #allocation2 [shape = 'u8[512]{0}', space=smem, size = 0x200, scoped, tag = 'input window, operand 0, single buffered']
    #allocation3 [shape = 's32[1]{0}', space=sflag, size = 0x4, scoped, tag = 'scoped memory for mynorm.1']
    %7 = vsyncpa [#allocation3], 0
    // Predicated region
    $region2: #{mynorm.1} parent=1 // pred_check
      _
    $region3: #{mynorm.1} parent=1 // pred_check_branch
      %9 = sbr.rel (0) target = $region5
    $region4: #{mynorm.1} parent=1 // pred_region
      %s11 = ssub.s32 16, 16
      %12 = vsyncadd [#allocation3], %s11
      %s14 = sshll.u32 %s0, 4
      %s15 = int_to_ptr.vmem [resolvable:$true] %s14
      %17 = dma.vmem_to_smem %s15, 16, [#allocation2], [#allocation3]
    $region5: #{mynorm.1} parent=1 // pred_fallthru
      _
    // Predicated region
    $region6: #{mynorm.1} parent=1 // pred_check
      _
    $region7: #{mynorm.1} parent=1 // pred_check_branch
      %19 = sbr.rel (0) target = $region9
    $region8: #{mynorm.1} parent=1 // pred_region
      _
    $region9: #{mynorm.1} parent=1 // pred_fallthru
      _
    // Predicated region
    $region10: #{mynorm.1} parent=1 // pred_check
      _
    $region11: #{mynorm.1} parent=1 // pred_check_branch
      %21 = sbr.rel (0) target = $region13
    $region12: #{mynorm.1} parent=1 // pred_region
      %22 = dma.done [#allocation3], 16
    $region13: #{mynorm.1} parent=1 // pred_fallthru
      _
    %23 = sfence
    %v24 = vld [vmem:[%s1] sm:$0xff]
    %v25 = vld [vmem:[%s1 + $0x8] sm:$0xff]
    %v28 = vcombine.high %v24, %v24
    %v29 = vcombine.high %v25, %v25
    %vm32 = vcmask 1043456
    %v33 = vsel %vm32, %v24, 0.0
    %v34 = vsel %vm32, %v28, 0.0
    %v35 = vadd.f32 %v33, %v34
    %36 = vadd.xlane.f32.xlu0 %v35
    %v37 = vpop.xlane.xlu0 %36
    %v38 = vsel %vm32, %v25, 0.0
    %v39 = vsel %vm32, %v29, 0.0
    %v40 = vadd.f32 %v38, %v39
    %41 = vadd.xlane.f32.xlu0 %v40
    %v42 = vpop.xlane.xlu0 %41
    %v43 = vmul.f32 %v24, %v24
    %v44 = vmul.f32 %v25, %v25
    %v47 = vcombine.high %v43, %v43
    %v48 = vcombine.high %v44, %v44
    %v51 = vsel %vm32, %v43, 0.0
    %v52 = vsel %vm32, %v47, 0.0
    %v53 = vadd.f32 %v51, %v52
    %54 = vadd.xlane.f32.xlu0 %v53
    %v55 = vpop.xlane.xlu0 %54
    %v56 = vsel %vm32, %v44, 0.0
    %v57 = vsel %vm32, %v48, 0.0
    %v58 = vadd.f32 %v56, %v57
    %59 = vadd.xlane.f32.xlu0 %v58
    %v60 = vpop.xlane.xlu0 %59
    %v61 = vsel %vm32, %v37, 0.0
    %v62 = vsel %vm32, %v42, 0.0
    %v63 = vadd.f32 %v61, %v62
    %v64 = vsel %vm32, %v55, 0.0
    %v65 = vsel %vm32, %v60, 0.0
    %v66 = vadd.f32 %v64, %v65
    %v67 = vrcp.pop 512.0
    %v68 = vmul.f32 %v63, %v67
    %v69 = vmul.f32 %v68, 512.0
    %v70 = vmul.f32 %v69, %v68
    %v71 = vsub.f32 %v66, %v70
    %v72 = vrcp.pop 511.0
    %v73 = vmul.f32 %v71, %v72
    %v74 = vmax.f32 %v73, 0.0
    %v75 = vrsqrt.pop %v74
    %v76 = vmul.f32 %v74, %v75
    %vm77 = vcmp.eq.f32.partialorder %v74, inf
    %v78 = vsel %vm77, %v74, %v76
    %vm79 = vcmp.eq.f32.partialorder %v74, 0.0
    %v80 = vand.u32 %v74, 2147483648
    %v81 = vsel %vm79, %v80, %v78
    %v82 = vadd.f32 %v81, 0.0001
    %v83 = vrsqrt.pop %v82
    %s84 = sld [smem:[#allocation2]]
    %v85 = vstv %s84
    %v86 = vmul.f32 %v83, %v85
    %s87 = sld [smem:[#allocation2 + $0x1]]
    %v88 = vmul.f32 %v68, %v86
    %v89 = vstv %s87
    %v90 = vsub.f32 %v89, %v88
    %v93 = vunpack.c.l.s4 839922192
    %v94 = vunpack.c.0.s8 %v93
    %v95 = vlaneseq
    %v96 = vshrl.u32 %v95, 7
    %v97 = vsub.s32 %v94, %v96
    %v98 = vrot.slane %v86, %v97
    %v100 = vmul.f32 %v24, %v98
    %v101 = vmul.f32 %v25, %v98
    %v104 = vunpack.c.l.s4 839922192
    %v105 = vunpack.c.0.s8 %v104
    %v106 = vlaneseq
    %v107 = vshrl.u32 %v106, 7
    %v108 = vsub.s32 %v105, %v107
    %v109 = vrot.slane %v90, %v108
    %v111 = vadd.f32 %v100, %v109
    %v112 = vadd.f32 %v101, %v109
    %113 = vst [vmem:[%s2] sm:$0xff] %v111
    %114 = vst [vmem:[%s2 + $0x8] sm:$0xff] %v112
    // Predicated region
    $region14: #{mynorm.1} parent=1 // pred_check
      _
    $region15: #{mynorm.1} parent=1 // pred_check_branch
      %116 = sbr.rel (0) target = $region17
    $region16: #{mynorm.1} parent=1 // pred_region
      _
    $region17: #{mynorm.1} parent=1 // pred_fallthru
      _
    // Predicated region
    $region18: #{mynorm.1} parent=1 // pred_check
      _
    $region19: #{mynorm.1} parent=1 // pred_check_branch
      %118 = sbr.rel (0) target = $region21
    $region20: #{mynorm.1} parent=1 // pred_region
      _
    $region21: #{mynorm.1} parent=1 // pred_fallthru
      _
    %119 = vsyncpa [#allocation3], 1

</llo_original>
